<compile_context>
chip_gen: v7x
topology: tpu7x:2x2x1
jax: 0.10.0
libtpu: 0.0.40
codegen_flags: <defaults>
</compile_context>

<pallas_src>
import functools

import jax
import jax.numpy as jnp
from jax.experimental import pallas as pl
from jax.experimental.pallas import tpu as pltpu


def _round_up(a, m):
    return pl.cdiv(a, m) * m


def _deconv_taps_kernel(x_ref, w_ref, b_ref, o_ref):
    # x_ref: (g, C_in, T)   T flattened spatial positions on the lane axis
    # w_ref: (K, C_in)      K = C_out*kH*kW, weight-norm already folded in
    # b_ref: (K, 1)         bias repeated per tap (f32)
    # o_ref: (g, K, T)
    w = w_ref[...]
    bias = b_ref[...]
    for i in range(x_ref.shape[0]):          # static unroll over the batch group
        acc = jnp.dot(w, x_ref[i], preferred_element_type=jnp.float32)
        o_ref[i] = (acc + bias).astype(o_ref.dtype)


def _choose_tiling(B, C_in, K, HW, in_bytes, out_bytes,
                   max_lane_tile=4096, block_budget_bytes=16 << 20):
    """Pick (spatial lane tile T, padded HWp, batch items per grid step g)."""
    # ---- spatial tile (lane axis) ----
    if HW <= max_lane_tile:
        T, HWp = HW, HW                      # full spatial dim: always legal, zero padding
    else:
        best = None
        for cand in (4096, 3584, 3072, 2560, 2048, 1536, 1024, 512, 256, 128):
            pad = _round_up(HW, cand)
            key = (pad / HW, -cand)          # minimize padding waste, prefer larger tiles
            if best is None or key < best[0]:
                best = (key, cand, pad)
        _, T, HWp = best
    # ---- batch items per grid step ----
    per_item = C_in * T * in_bytes + K * T * out_bytes
    g_cap = int(max(1, min(32, block_budget_bytes // (2 * per_item))))
    divisors = [d for d in range(1, B + 1) if B % d == 0]
    g = max(d for d in divisors if d <= g_cap)
    # keep >=2 grid steps (both v7x TensorCores busy) when the batch allows it
    n_t = HWp // T
    if n_t < 2 and B // g < 2 <= B:
        smaller = [d for d in divisors if d < g and B // d >= 2]
        if smaller and max(smaller) * per_item >= (1 << 19):   # >= ~0.5 MiB / step
            g = max(smaller)
    return T, HWp, g


@functools.partial(jax.jit, static_argnames=("filter_size", "stride"))
def down_right_shifted_deconv2d_forward(x, v, g, b, *, filter_size=(2, 2), stride=(2, 2)):
    """Forward of down_right_shifted_deconv2d.

    x: (B, C_in, H, W)  NCHW
    v: (C_in, C_out, kH, kW)   ConvTranspose2d weight_v (PyTorch layout)
    g: (C_in,)                 weight_norm g (dim=0)
    b: (C_out,)                bias
    returns: (B, C_out, 2H, 2W)
    """
    kH, kW = filter_size
    sH, sW = stride
    assert (kH, kW) == (2, 2) and (sH, sW) == (2, 2), \
        "only the PixelCNN++ configuration filter_size == stride == (2,2) is supported"

    B, C_in, H, W = x.shape
    v_cin, C_out, _, _ = v.shape
    assert v_cin == C_in

    # --- weight_norm(dim=0): W[ci] = g[ci] * v[ci] / ||v[ci]||  (once, in f32) ---
    v32 = v.astype(jnp.float32)
    norm = jnp.sqrt(jnp.sum(v32 * v32, axis=(1, 2, 3), keepdims=True))
    w = (g.reshape(C_in, 1, 1, 1).astype(jnp.float32) / norm) * v32   # (C_in, C_out, kH, kW)

    # K ordered (C_out, kH, kW): trailing pixel-shuffle only permutes trailing dims.
    K = C_out * kH * kW
    w_mat = jnp.transpose(w, (1, 2, 3, 0)).reshape(K, C_in).astype(x.dtype)
    b_col = jnp.repeat(b.astype(jnp.float32), kH * kW).reshape(K, 1)

    # --- flatten spatial onto the lane axis (no NCHW<->NHWC transpose) ---
    HW = H * W
    in_bytes = x.dtype.itemsize
    out_dtype = x.dtype
    out_bytes = in_bytes
    T, HWp, gb = _choose_tiling(B, C_in, K, HW, in_bytes, out_bytes)

    x_flat = x.reshape(B, C_in, HW)
    if HWp != HW:
        x_flat = jnp.pad(x_flat, ((0, 0), (0, 0), (0, HWp - HW)))

    grid = (B // gb, HWp // T)

    # Explicit VMEM budget: double-buffered in/out blocks + resident weights/bias.
    block_bytes = 2 * gb * (C_in * T * in_bytes + K * T * out_bytes)
    const_bytes = 2 * (K * C_in * in_bytes + K * 4)
    vmem_limit = int(min(48 << 20,
                         max(32 << 20, int(1.25 * (block_bytes + const_bytes)) + (4 << 20))))

    cost = pl.CostEstimate(
        flops=2 * B * K * C_in * HW,
        transcendentals=0,
        bytes_accessed=(B * C_in * HWp * in_bytes + K * C_in * in_bytes + K * 4
                        + B * K * HWp * out_bytes),
    )

    y = pl.pallas_call(
        _deconv_taps_kernel,
        out_shape=jax.ShapeDtypeStruct((B, K, HWp), out_dtype),
        grid=grid,
        in_specs=[
            pl.BlockSpec((gb, C_in, T), lambda bi, ti: (bi, 0, ti)),
            pl.BlockSpec((K, C_in), lambda bi, ti: (0, 0)),
            pl.BlockSpec((K, 1), lambda bi, ti: (0, 0)),
        ],
        out_specs=pl.BlockSpec((gb, K, T), lambda bi, ti: (bi, 0, ti)),
        compiler_params=pltpu.CompilerParams(
            dimension_semantics=("parallel", "parallel"),
            vmem_limit_bytes=vmem_limit,
        ),
        cost_estimate=cost,
    )(x_flat, w_mat, b_col)

    # --- single fused pixel-shuffle: out[b,co,2h+kh,2w+kw] = y[b,(co,kh,kw),h,w] ---
    y = y[:, :, :HW].reshape(B, C_out, kH, kW, H, W)
    y = jnp.transpose(y, (0, 1, 4, 2, 5, 3))             # (B, C_out, H, kH, W, kW)
    out = y.reshape(B, C_out, kH * H, kW * W)             # (B, C_out, 2H, 2W)
    return out


def _reference(x, v, g, b, filter_size=(2, 2), stride=(2, 2), output_padding=1):
    """Pure-JAX reference matching PyTorch ConvTranspose2d + crop exactly."""
    kH, kW = filter_size
    sH, sW = stride
    v32 = v.astype(jnp.float32)
    norm = jnp.sqrt(jnp.sum(v32 * v32, axis=(1, 2, 3), keepdims=True))
    w = (g.reshape(-1, 1, 1, 1).astype(jnp.float32) / norm) * v32   # (C_in, C_out, kH, kW)

    B, C_in, H, W = x.shape
    C_out = w.shape[1]
    Hout = (H - 1) * sH + kH + output_padding
    Wout = (W - 1) * sW + kW + output_padding
    out = jnp.zeros((B, C_out, Hout, Wout), jnp.float32) + b.reshape(1, -1, 1, 1)
    x32 = x.astype(jnp.float32)
    for kh in range(kH):
        for kw in range(kW):
            contrib = jnp.einsum("bihw,io->bohw", x32, w[:, :, kh, kw])
            out = out.at[:, :, kh:kh + sH * H:sH, kw:kw + sW * W:sW].add(contrib)
    # down/right shift crop
    out = out[:, :, :Hout - kH + 1, :Wout - kW + 1]
    return out


if __name__ == "__main__":
    key = jax.random.PRNGKey(0)
    k_x, k_v, k_b = jax.random.split(key, 3)

    B, C_in, H, W = 2, 4, 16, 16
    C_out = 8
    filter_size = (2, 2)
    stride = (2, 2)

    x = jax.random.normal(k_x, (B, C_in, H, W), dtype=jnp.float32)
    v = jax.random.normal(k_v, (C_in, C_out, *filter_size), dtype=jnp.float32) * 0.1
    # weight_norm init: g = ||v|| per dim-0 slice (deterministic mimic of PyTorch init)
    g = jnp.sqrt(jnp.sum(v * v, axis=(1, 2, 3)))
    b = jax.random.normal(k_b, (C_out,), dtype=jnp.float32) * 0.01

    out = down_right_shifted_deconv2d_forward(x, v, g, b,
                                              filter_size=filter_size, stride=stride)
    out = jax.block_until_ready(out)

    ref = _reference(x, v, g, b, filter_size=filter_size, stride=stride)
    assert out.shape == (B, C_out, 2 * H, 2 * W), out.shape
    assert jnp.allclose(out, ref, atol=1e-4, rtol=1e-4)

    print("KERNEL_OK")
</pallas_src>

<mosaic_0001>
module attributes {stable_mosaic.version = 11 : i64} {
  func.func @_deconv_taps_kernel(%arg0: i32, %arg1: i32, %arg2: memref<2x4x256xf32, #tpu.memory_space<vmem>>, %arg3: memref<32x4xf32, #tpu.memory_space<vmem>>, %arg4: memref<32x1xf32, #tpu.memory_space<vmem>>, %arg5: memref<2x32x256xf32, #tpu.memory_space<vmem>>) attributes {dimension_semantics = [#tpu.dimension_semantics<parallel>, #tpu.dimension_semantics<parallel>], iteration_bounds = array<i64: 1, 1>, scalar_prefetch = 0 : i64, scratch_operands = 0 : i64, tpu.core_type = #tpu.core_type<tc>, window_params = [{transform_indices = @transform_0, window_bounds = array<i64: 2, 4, 256>}, {pipeline_mode = #tpu.pipeline_mode<synchronous>, transform_indices = @transform_1, window_bounds = array<i64: 32, 4>}, {pipeline_mode = #tpu.pipeline_mode<synchronous>, transform_indices = @transform_2, window_bounds = array<i64: 32, 1>}, {transform_indices = @transform_3, window_bounds = array<i64: 2, 32, 256>}]} {
    %c0 = arith.constant 0 : index
    %c0_0 = arith.constant 0 : index
    %0 = vector.load %arg3[%c0, %c0_0] : memref<32x4xf32, #tpu.memory_space<vmem>>, vector<32x4xf32>
    %c0_1 = arith.constant 0 : index
    %c0_2 = arith.constant 0 : index
    %1 = vector.load %arg4[%c0_1, %c0_2] : memref<32x1xf32, #tpu.memory_space<vmem>>, vector<32x1xf32>
    %c0_3 = arith.constant 0 : index
    %c0_4 = arith.constant 0 : index
    %c0_5 = arith.constant 0 : index
    %2 = vector.load %arg2[%c0_3, %c0_4, %c0_5] : memref<2x4x256xf32, #tpu.memory_space<vmem>>, vector<1x4x256xf32>
    %3 = vector.shape_cast %2 : vector<1x4x256xf32> to vector<4x256xf32>
    %cst = arith.constant dense<0.000000e+00> : vector<32x256xf32>
    %4 = tpu.matmul %0, %3, %cst {dimension_numbers = #tpu.dot_dimension_numbers<[1], [0], [0], [1], [0, 0, 1, 1], [], []>} : vector<32x4xf32>, vector<4x256xf32>, vector<32x256xf32> -> vector<32x256xf32>
    %5 = vector.broadcast %1 : vector<32x1xf32> to vector<32x256xf32>
    %6 = arith.addf %4, %5 : vector<32x256xf32>
    %c0_6 = arith.constant 0 : index
    %c0_7 = arith.constant 0 : index
    %c0_8 = arith.constant 0 : index
    %7 = vector.load %arg5[%c0_6, %c0_7, %c0_8] : memref<2x32x256xf32, #tpu.memory_space<vmem>>, vector<1x32x256xf32>
    %8 = vector.shape_cast %7 : vector<1x32x256xf32> to vector<32x256xf32>
    %9 = vector.shape_cast %6 : vector<32x256xf32> to vector<1x32x256xf32>
    tpu.vector_store %arg5[%c0_6, %c0_7, %c0_8], %9 {strides = array<i32>} : memref<2x32x256xf32, #tpu.memory_space<vmem>>, vector<1x32x256xf32>,
    %c1 = arith.constant 1 : index
    %c0_9 = arith.constant 0 : index
    %c0_10 = arith.constant 0 : index
    %10 = vector.load %arg2[%c1, %c0_9, %c0_10] : memref<2x4x256xf32, #tpu.memory_space<vmem>>, vector<1x4x256xf32>
    %11 = vector.shape_cast %10 : vector<1x4x256xf32> to vector<4x256xf32>
    %cst_11 = arith.constant dense<0.000000e+00> : vector<32x256xf32>
    %12 = tpu.matmul %0, %11, %cst_11 {dimension_numbers = #tpu.dot_dimension_numbers<[1], [0], [0], [1], [0, 0, 1, 1], [], []>} : vector<32x4xf32>, vector<4x256xf32>, vector<32x256xf32> -> vector<32x256xf32>
    %13 = vector.broadcast %1 : vector<32x1xf32> to vector<32x256xf32>
    %14 = arith.addf %12, %13 : vector<32x256xf32>
    %c1_12 = arith.constant 1 : index
    %c0_13 = arith.constant 0 : index
    %c0_14 = arith.constant 0 : index
    %15 = vector.load %arg5[%c1_12, %c0_13, %c0_14] : memref<2x32x256xf32, #tpu.memory_space<vmem>>, vector<1x32x256xf32>
    %16 = vector.shape_cast %15 : vector<1x32x256xf32> to vector<32x256xf32>
    %17 = vector.shape_cast %14 : vector<32x256xf32> to vector<1x32x256xf32>
    tpu.vector_store %arg5[%c1_12, %c0_13, %c0_14], %17 {strides = array<i32>} : memref<2x32x256xf32, #tpu.memory_space<vmem>>, vector<1x32x256xf32>,
    return
  }
  func.func @transform_0(%arg0: i32, %arg1: i32) -> (i32, i32, i32) {
    %c0_i32 = arith.constant 0 : i32
    %c0_i32_0 = arith.constant 0 : i32
    return %arg0, %c0_i32, %arg1 : i32, i32, i32
  }
  func.func @transform_1(%arg0: i32, %arg1: i32) -> (i32, i32) {
    %c0_i32 = arith.constant 0 : i32
    %c0_i32_0 = arith.constant 0 : i32
    %c0_i32_1 = arith.constant 0 : i32
    return %c0_i32, %c0_i32_0 : i32, i32
  }
  func.func @transform_2(%arg0: i32, %arg1: i32) -> (i32, i32) {
    %c0_i32 = arith.constant 0 : i32
    %c0_i32_0 = arith.constant 0 : i32
    %c0_i32_1 = arith.constant 0 : i32
    return %c0_i32, %c0_i32_0 : i32, i32
  }
  func.func @transform_3(%arg0: i32, %arg1: i32) -> (i32, i32, i32) {
    %c0_i32 = arith.constant 0 : i32
    %c0_i32_0 = arith.constant 0 : i32
    return %arg0, %c0_i32, %arg1 : i32, i32, i32
  }
}

</mosaic_0001>

<llo_original>
// kernel: down_right_shifted_deconv2d_forward.1
$region0: #{down_right_shifted_deconv2d_forward.1}
  #allocation0 [shape = 'u32[]', space=smem, size = 0x4, offset = 0x4, fixed_abs, tag = 'smem constant byte address 0x4 - core index']
  #allocation1 [shape = 'u32[144,128]{1,0:T(1,128)}', space=vmem, size = 0x12000, scoped, tag = 'internal scratch']
  %s0 = inlined_call_operand.vmem [shape: f32[2,4,256], index: 0, kind: input, shape index: {}]
  %s1 = inlined_call_operand.vmem [shape: f32[32,4], index: 1, kind: input, shape index: {}]
  %s2 = inlined_call_operand.vmem [shape: f32[32,1], index: 2, kind: input, shape index: {}]
  %s3 = inlined_call_operand.vmem [shape: f32[2,32,256], index: 3, kind: output, shape index: {}]
  %s4 = sld [smem:[#allocation0]]
  $region22: #{down_right_shifted_deconv2d_forward.1} parent=0
    _
  %s6 = ssub.s32 1, %s4
  %s7 = scalar_select 0, %s6, %s4
  // Predicated region
  $region2: #{down_right_shifted_deconv2d_forward.1} parent=0 // pred_check
    _
  $region3: #{down_right_shifted_deconv2d_forward.1} parent=0 // pred_check_branch
    %9 = sbr.rel (0) target = $region5
  $region4: #{down_right_shifted_deconv2d_forward.1} parent=0 // pred_region
    _
  $region5: #{down_right_shifted_deconv2d_forward.1} parent=0 // pred_fallthru
    _
  // Predicated region
  $region6: #{down_right_shifted_deconv2d_forward.1} parent=0 // pred_check
    _
  $region7: #{down_right_shifted_deconv2d_forward.1} parent=0 // pred_check_branch
    %11 = sbr.rel (0) target = $region9
  $region8: #{down_right_shifted_deconv2d_forward.1} parent=0 // pred_region
    _
  $region9: #{down_right_shifted_deconv2d_forward.1} parent=0 // pred_fallthru
    _
  // Predicated region
  $region10: #{down_right_shifted_deconv2d_forward.1} parent=0 // pred_check
    _
  $region11: #{down_right_shifted_deconv2d_forward.1} parent=0 // pred_check_branch
    %13 = sbr.rel (0) target = $region13
  $region12: #{down_right_shifted_deconv2d_forward.1} parent=0 // pred_region
    _
  $region13: #{down_right_shifted_deconv2d_forward.1} parent=0 // pred_fallthru
    _
  %v14 = vld [vmem:[%s1] sm:$0xff]
  %v15 = vld [vmem:[%s1 + $0x8] sm:$0xff]
  %v16 = vld [vmem:[%s1 + $0x10] sm:$0xff]
  %v17 = vld [vmem:[%s1 + $0x18] sm:$0xff]
  %v18 = vld [vmem:[%s2] sm:$0xff]
  %v19 = vld [vmem:[%s2 + $0x8] sm:$0xff]
  %v20 = vld [vmem:[%s2 + $0x10] sm:$0xff]
  %v21 = vld [vmem:[%s2 + $0x18] sm:$0xff]
  %v22 = vld [vmem:[%s0] sm:$0xff]
  %24 = vset.pattern.permute.xlu0 0
  %25 = vperm.xlu0 %24, %v18
  %v26 = vpop.permute.xlu0 %25
  %29 = vset.pattern.permute.xlu0 0
  %30 = vperm.xlu0 %29, %v19
  %v31 = vpop.permute.xlu0 %30
  %34 = vset.pattern.permute.xlu0 0
  %35 = vperm.xlu0 %34, %v20
  %v36 = vpop.permute.xlu0 %35
  %39 = vset.pattern.permute.xlu0 0
  %40 = vperm.xlu0 %39, %v21
  %v41 = vpop.permute.xlu0 %40
  %v44 = vcombine.high %v22, %v22
  %vm45 = vcmask 31744
  %v47 = vsel %vm45, %v14, 0
  %v50 = vsel %vm45, %v15, 0
  %v53 = vsel %vm45, %v16, 0
  %v56 = vsel %vm45, %v17, 0
  %vm58 = vcmask 1043456
  %v59 = vsel %vm58, %v22, 0
  %v61 = vsel %vm58, %v44, 0
  %63 = vmatprep.subr.mxu0 %v61
  %64 = vmatpush1.msra.mxu0 %v59
  %65 = vmatprep.subr.mxu0 0.0
  %66 = vmatpush1.msra.mxu0 0.0
  %67 = vmatprep.subr.mxu0 0.0
  %68 = vmatpush1.msra.mxu0 0.0
  %69 = vmatprep.subr.mxu0 0.0
  %70 = vmatpush1.msra.mxu0 0.0
  %71 = vmatprep.subr.mxu0 0.0
  %72 = vmatpush1.msra.mxu0 0.0
  %73 = vmatprep.subr.mxu0 0.0
  %74 = vmatpush1.msra.mxu0 0.0
  %75 = vmatprep.subr.mxu0 0.0
  %76 = vmatpush1.msra.mxu0 0.0
  %77 = vmatprep.subr.mxu0 0.0
  %78 = vmatpush1.msra.mxu0 0.0
  %79 = vmatprep.subr.mxu0 0.0
  %80 = vmatpush1.msra.mxu0 0.0
  %81 = vmatprep.subr.mxu0 0.0
  %82 = vmatpush1.msra.mxu0 0.0
  %83 = vmatprep.subr.mxu0 0.0
  %84 = vmatpush1.msra.mxu0 0.0
  %85 = vmatprep.subr.mxu0 0.0
  %86 = vmatpush1.msra.mxu0 0.0
  %87 = vmatprep.subr.mxu0 0.0
  %88 = vmatpush1.msra.mxu0 0.0
  %89 = vmatprep.subr.mxu0 0.0
  %90 = vmatpush1.msra.mxu0 0.0
  %91 = vmatprep.subr.mxu0 0.0
  %92 = vmatpush1.msra.mxu0 0.0
  %93 = vmatprep.subr.mxu0 0.0
  %94 = vmatpush1.msra.mxu0 0.0
  %95 = vmatprep.subr.mxu0 0.0
  %96 = vmatpush1.msra.mxu0 0.0
  %97 = vmatprep.subr.mxu0 0.0
  %98 = vmatpush1.msra.mxu0 0.0
  %99 = vmatprep.subr.mxu0 0.0
  %100 = vmatpush1.msra.mxu0 0.0
  %101 = vmatprep.subr.mxu0 0.0
  %102 = vmatpush1.msra.mxu0 0.0
  %103 = vmatprep.subr.mxu0 0.0
  %104 = vmatpush1.msra.mxu0 0.0
  %105 = vmatprep.subr.mxu0 0.0
  %106 = vmatpush1.msra.mxu0 0.0
  %107 = vmatprep.subr.mxu0 0.0
  %108 = vmatpush1.msra.mxu0 0.0
  %109 = vmatprep.subr.mxu0 0.0
  %110 = vmatpush1.msra.mxu0 0.0
  %111 = vmatprep.subr.mxu0 0.0
  %112 = vmatpush1.msra.mxu0 0.0
  %113 = vmatprep.subr.mxu0 0.0
  %114 = vmatpush1.msra.mxu0 0.0
  %115 = vmatprep.subr.mxu0 0.0
  %116 = vmatpush1.msra.mxu0 0.0
  %117 = vmatprep.subr.mxu0 0.0
  %118 = vmatpush1.msra.mxu0 0.0
  %119 = vmatprep.subr.mxu0 0.0
  %120 = vmatpush1.msra.mxu0 0.0
  %121 = vmatprep.subr.mxu0 0.0
  %122 = vmatpush1.msra.mxu0 0.0
  %123 = vmatprep.subr.mxu0 0.0
  %124 = vmatpush1.msra.mxu0 0.0
  %125 = vmatprep.subr.mxu0 0.0
  %126 = vmatpush1.msra.mxu0 0.0
  %127 = vmatprep.mubr.f32.mxu0 0.0
  %128 = vmatmul.mubr.f32.gmra.mrb[0].mxu0 %v47
  %v129 = vpop.f32.mrb[0].mxu0
  %v130 = vadd.f32 %v26, %v129
  %v131 = vpop.f32.mrb[0].mxu0
  %v132 = vadd.f32 %v26, %v131
  %133 = vmatprep.mubr.f32.mxu0 0.0
  %134 = vmatmul.mubr.f32.gmra.mrb[0].mxu0 %v50
  %v135 = vpop.f32.mrb[0].mxu0
  %v136 = vadd.f32 %v31, %v135
  %v137 = vpop.f32.mrb[0].mxu0
  %v138 = vadd.f32 %v31, %v137
  %139 = vmatprep.mubr.f32.mxu0 0.0
  %140 = vmatmul.mubr.f32.gmra.mrb[0].mxu0 %v53
  %v141 = vpop.f32.mrb[0].mxu0
  %v142 = vadd.f32 %v36, %v141
  %v143 = vpop.f32.mrb[0].mxu0
  %v144 = vadd.f32 %v36, %v143
  %145 = vmatprep.mubr.f32.mxu0 0.0
  %146 = vmatmul.mubr.f32.gmra.mrb[0].mxu0 %v56
  %v147 = vpop.f32.mrb[0].mxu0
  %v148 = vadd.f32 %v41, %v147
  %v149 = vpop.f32.mrb[0].mxu0
  %v150 = vadd.f32 %v41, %v149
  %151 = vdwg.mxu0
  %152 = vst [vmem:[%s3] sm:$0xff] %v130
  %153 = vst [vmem:[%s3 + $0x8] sm:$0xff] %v132
  %154 = vst [vmem:[%s3 + $0x10] sm:$0xff] %v136
  %155 = vst [vmem:[%s3 + $0x18] sm:$0xff] %v138
  %156 = vst [vmem:[%s3 + $0x20] sm:$0xff] %v142
  %157 = vst [vmem:[%s3 + $0x28] sm:$0xff] %v144
  %158 = vst [vmem:[%s3 + $0x30] sm:$0xff] %v148
  %159 = vst [vmem:[%s3 + $0x38] sm:$0xff] %v150
  %s160 = scalar_lea.vmem %s0, 8
  %v161 = vld [vmem:[%s160] sm:$0xff]
  %v163 = vcombine.high %v161, %v161
  %v164 = vsel %vm58, %v161, 0
  %v166 = vsel %vm58, %v163, 0
  %168 = vmatprep.subr.mxu0 %v166
  %169 = vmatpush1.msra.mxu0 %v164
  %170 = vmatprep.subr.mxu0 0.0
  %171 = vmatpush1.msra.mxu0 0.0
  %172 = vmatprep.subr.mxu0 0.0
  %173 = vmatpush1.msra.mxu0 0.0
  %174 = vmatprep.subr.mxu0 0.0
  %175 = vmatpush1.msra.mxu0 0.0
  %176 = vmatprep.subr.mxu0 0.0
  %177 = vmatpush1.msra.mxu0 0.0
  %178 = vmatprep.subr.mxu0 0.0
  %179 = vmatpush1.msra.mxu0 0.0
  %180 = vmatprep.subr.mxu0 0.0
  %181 = vmatpush1.msra.mxu0 0.0
  %182 = vmatprep.subr.mxu0 0.0
  %183 = vmatpush1.msra.mxu0 0.0
  %184 = vmatprep.subr.mxu0 0.0
  %185 = vmatpush1.msra.mxu0 0.0
  %186 = vmatprep.subr.mxu0 0.0
  %187 = vmatpush1.msra.mxu0 0.0
  %188 = vmatprep.subr.mxu0 0.0
  %189 = vmatpush1.msra.mxu0 0.0
  %190 = vmatprep.subr.mxu0 0.0
  %191 = vmatpush1.msra.mxu0 0.0
  %192 = vmatprep.subr.mxu0 0.0
  %193 = vmatpush1.msra.mxu0 0.0
  %194 = vmatprep.subr.mxu0 0.0
  %195 = vmatpush1.msra.mxu0 0.0
  %196 = vmatprep.subr.mxu0 0.0
  %197 = vmatpush1.msra.mxu0 0.0
  %198 = vmatprep.subr.mxu0 0.0
  %199 = vmatpush1.msra.mxu0 0.0
  %200 = vmatprep.subr.mxu0 0.0
  %201 = vmatpush1.msra.mxu0 0.0
  %202 = vmatprep.subr.mxu0 0.0
  %203 = vmatpush1.msra.mxu0 0.0
  %204 = vmatprep.subr.mxu0 0.0
  %205 = vmatpush1.msra.mxu0 0.0
  %206 = vmatprep.subr.mxu0 0.0
  %207 = vmatpush1.msra.mxu0 0.0
  %208 = vmatprep.subr.mxu0 0.0
  %209 = vmatpush1.msra.mxu0 0.0
  %210 = vmatprep.subr.mxu0 0.0
  %211 = vmatpush1.msra.mxu0 0.0
  %212 = vmatprep.subr.mxu0 0.0
  %213 = vmatpush1.msra.mxu0 0.0
  %214 = vmatprep.subr.mxu0 0.0
  %215 = vmatpush1.msra.mxu0 0.0
  %216 = vmatprep.subr.mxu0 0.0
  %217 = vmatpush1.msra.mxu0 0.0
  %218 = vmatprep.subr.mxu0 0.0
  %219 = vmatpush1.msra.mxu0 0.0
  %220 = vmatprep.subr.mxu0 0.0
  %221 = vmatpush1.msra.mxu0 0.0
  %222 = vmatprep.subr.mxu0 0.0
  %223 = vmatpush1.msra.mxu0 0.0
  %224 = vmatprep.subr.mxu0 0.0
  %225 = vmatpush1.msra.mxu0 0.0
  %226 = vmatprep.subr.mxu0 0.0
  %227 = vmatpush1.msra.mxu0 0.0
  %228 = vmatprep.subr.mxu0 0.0
  %229 = vmatpush1.msra.mxu0 0.0
  %230 = vmatprep.subr.mxu0 0.0
  %231 = vmatpush1.msra.mxu0 0.0
  %232 = vmatprep.mubr.f32.mxu0 0.0
  %233 = vmatmul.mubr.f32.gmra.mrb[0].mxu0 %v47
  %v234 = vpop.f32.mrb[0].mxu0
  %v235 = vadd.f32 %v26, %v234
  %v236 = vpop.f32.mrb[0].mxu0
  %v237 = vadd.f32 %v26, %v236
  %238 = vmatprep.mubr.f32.mxu0 0.0
  %239 = vmatmul.mubr.f32.gmra.mrb[0].mxu0 %v50
  %v240 = vpop.f32.mrb[0].mxu0
  %v241 = vadd.f32 %v31, %v240
  %v242 = vpop.f32.mrb[0].mxu0
  %v243 = vadd.f32 %v31, %v242
  %244 = vmatprep.mubr.f32.mxu0 0.0
  %245 = vmatmul.mubr.f32.gmra.mrb[0].mxu0 %v53
  %v246 = vpop.f32.mrb[0].mxu0
  %v247 = vadd.f32 %v36, %v246
  %v248 = vpop.f32.mrb[0].mxu0
  %v249 = vadd.f32 %v36, %v248
  %250 = vmatprep.mubr.f32.mxu0 0.0
  %251 = vmatmul.mubr.f32.gmra.mrb[0].mxu0 %v56
  %v252 = vpop.f32.mrb[0].mxu0
  %v253 = vadd.f32 %v41, %v252
  %v254 = vpop.f32.mrb[0].mxu0
  %v255 = vadd.f32 %v41, %v254
  %256 = vdwg.mxu0
  %s257 = scalar_lea.vmem %s3, 64
  %258 = vst [vmem:[%s257] sm:$0xff] %v235
  %259 = vst [vmem:[%s257 + $0x8] sm:$0xff] %v237
  %260 = vst [vmem:[%s257 + $0x10] sm:$0xff] %v241
  %261 = vst [vmem:[%s257 + $0x18] sm:$0xff] %v243
  %262 = vst [vmem:[%s257 + $0x20] sm:$0xff] %v247
  %263 = vst [vmem:[%s257 + $0x28] sm:$0xff] %v249
  %264 = vst [vmem:[%s257 + $0x30] sm:$0xff] %v253
  %265 = vst [vmem:[%s257 + $0x38] sm:$0xff] %v255
  // Predicated region
  $region14: #{down_right_shifted_deconv2d_forward.1} parent=0 // pred_check
    _
  $region15: #{down_right_shifted_deconv2d_forward.1} parent=0 // pred_check_branch
    %267 = sbr.rel (0) target = $region17
  $region16: #{down_right_shifted_deconv2d_forward.1} parent=0 // pred_region
    _
  $region17: #{down_right_shifted_deconv2d_forward.1} parent=0 // pred_fallthru
    _
  // Predicated region
  $region18: #{down_right_shifted_deconv2d_forward.1} parent=0 // pred_check
    _
  $region19: #{down_right_shifted_deconv2d_forward.1} parent=0 // pred_check_branch
    %269 = sbr.rel (0) target = $region21
  $region20: #{down_right_shifted_deconv2d_forward.1} parent=0 // pred_region
    _
  $region21: #{down_right_shifted_deconv2d_forward.1} parent=0 // pred_fallthru
    _

</llo_original>
